<compile_context>
chip_gen: v7x
topology: tpu7x:2x2x1
jax: 0.10.0
libtpu: 0.0.40
codegen_flags: <defaults>
</compile_context>

<pallas_src>
import jax
import jax.numpy as jnp
from jax.experimental import pallas as pl
from jax.experimental.pallas import tpu as pltpu


# ----------------------------------------------------------------------------
# helpers
# ----------------------------------------------------------------------------
def _round_up(x: int, m: int) -> int:
    return ((x + m - 1) // m) * m


def _cdiv(a: int, b: int) -> int:
    return -(-a // b)


def _balanced_tile(dim: int, tile_max: int, align: int) -> int:
    """Largest tile <= tile_max that splits `dim` into near-equal aligned tiles."""
    n_tiles = max(1, _cdiv(dim, tile_max))
    tile = _round_up(_cdiv(dim, n_tiles), align)
    return max(align, min(tile, _round_up(dim, align)))


def _hw_limits():
    """Generation-aware tile caps and VMEM budget."""
    vmem_bytes = 128 * 1024 * 1024
    try:
        info = pltpu.get_tpu_info()
        for name in ("vmem_capacity_bytes", "vmem_bytes"):
            v = getattr(info, name, None)
            if v:
                vmem_bytes = int(v)
                break
    except Exception:
        pass
    if vmem_bytes <= 64 * 1024 * 1024:
        # v7x-like: half the VMEM of v5e/v6e, 2 TensorCores per chip.
        return dict(tm_max=1024, tn_max=1024, tk_max=1024,
                    vmem_cap=44 * 1024 * 1024, min_parallel_tiles=2)
    # v5e / v6e: 128 MiB VMEM, single TensorCore.
    return dict(tm_max=1024, tn_max=1024, tk_max=1024,
                vmem_cap=100 * 1024 * 1024, min_parallel_tiles=1)


def _choose_nk_tiles(N: int, K: int, hw):
    tn = _balanced_tile(N, hw["tn_max"], 128)
    tk = _balanced_tile(K, hw["tk_max"], 128)
    if hw["min_parallel_tiles"] > 1 and _round_up(N, 128) >= 256:
        # 2 TensorCores: keep >= 2 output tiles along N even for small-M
        # (decode-style) shapes so both cores get work.
        n_splits = max(2, _cdiv(N, hw["tn_max"]))
        tn = _round_up(_cdiv(N, n_splits), 128)
    return tn, tk


def _choose_m_tile(M: int, hw, align_m: int) -> int:
    return _balanced_tile(M, hw["tm_max"], align_m)


# ----------------------------------------------------------------------------
# kernels
# ----------------------------------------------------------------------------
def _linear_relu_kernel_f32out(x_ref, w_ref, b_ref, o_ref):
    # x_ref: (tm, tk) compute dtype   w_ref: (tk, tn) compute dtype (K, N layout)
    # b_ref: (1, tn) float32          o_ref: (tm, tn) float32, resident across K.
    # f32 output: accumulate directly in the resident output tile (no scratch).
    k = pl.program_id(2)

    @pl.when(k == 0)
    def _init():
        o_ref[...] = jnp.zeros_like(o_ref)

    o_ref[...] += jnp.dot(x_ref[...], w_ref[...],
                          preferred_element_type=jnp.float32)

    @pl.when(k == pl.num_programs(2) - 1)
    def _finalize():
        o_ref[...] = jnp.maximum(o_ref[...] + b_ref[...], 0.0)


def _linear_relu_kernel_acc(x_ref, w_ref, b_ref, o_ref, acc_ref):
    # Variant with a separate f32 accumulator, used when out dtype != f32.
    k = pl.program_id(2)

    @pl.when(k == 0)
    def _init():
        acc_ref[...] = jnp.zeros_like(acc_ref)

    acc_ref[...] += jnp.dot(x_ref[...], w_ref[...],
                            preferred_element_type=jnp.float32)

    @pl.when(k == pl.num_programs(2) - 1)
    def _finalize():
        o_ref[...] = jnp.maximum(acc_ref[...] + b_ref[...], 0.0).astype(o_ref.dtype)


# ----------------------------------------------------------------------------
# wrappers
# ----------------------------------------------------------------------------
def prepare_weight_bias(weight, bias, compute_dtype, tn, tk):
    """One-time cast + transpose to (K, N) + pad (hoisted out of the hot path)."""
    N, K = weight.shape
    N_pad = _round_up(N, tn)
    K_pad = _round_up(K, tk)
    w_t = weight.T.astype(compute_dtype)            # (K, N): plain MXU contraction
    if (K_pad, N_pad) != (K, N):
        w_t = jnp.pad(w_t, ((0, K_pad - K), (0, N_pad - N)))
    b = bias.astype(jnp.float32).reshape(1, N)
    if N_pad != N:
        b = jnp.pad(b, ((0, 0), (0, N_pad - N)))
    return w_t, b


def _linear_relu_prepared(x, w_t_pad, b_pad, n_out, *, tn, tk, compute_dtype,
                          hw, out_dtype=None):
    M, K = x.shape
    K_pad, N_pad = w_t_pad.shape
    assert K_pad >= K and K_pad % tk == 0 and N_pad % tn == 0
    out_dtype = x.dtype if out_dtype is None else out_dtype

    itemsize_c = jnp.dtype(compute_dtype).itemsize
    align_m = 16 if itemsize_c < 4 else 8
    tm = _choose_m_tile(M, hw, align_m)
    M_pad = _round_up(M, tm)

    x_c = x.astype(compute_dtype)
    if (M_pad, K_pad) != (M, K):
        x_c = jnp.pad(x_c, ((0, M_pad - M), (0, K_pad - K)))

    grid = (M_pad // tm, N_pad // tn, K_pad // tk)
    gm, gn, gk = grid

    inplace = jnp.dtype(out_dtype) == jnp.dtype(jnp.float32)
    kernel = _linear_relu_kernel_f32out if inplace else _linear_relu_kernel_acc
    scratch = [] if inplace else [pltpu.VMEM((tm, tn), jnp.float32)]

    out_itemsize = jnp.dtype(out_dtype).itemsize
    vmem_est = (2 * tm * tk * itemsize_c             # x tiles (double buffered)
                + 2 * tk * tn * itemsize_c           # W^T tiles
                + 2 * tm * tn * out_itemsize         # output tiles
                + (0 if inplace else tm * tn * 4)    # f32 accumulator
                + 2 * tn * 4)                        # bias
    vmem_limit = int(min(max(2 * vmem_est, 32 * 1024 * 1024), hw["vmem_cap"]))
    vmem_limit = max(vmem_limit, int(1.25 * vmem_est))

    cost = pl.CostEstimate(
        flops=2 * M_pad * N_pad * K_pad,
        transcendentals=0,
        bytes_accessed=(gn * M_pad * K_pad + gm * K_pad * N_pad) * itemsize_c
        + M_pad * N_pad * out_itemsize + N_pad * 4,
    )

    out_padded = pl.pallas_call(
        kernel,
        out_shape=jax.ShapeDtypeStruct((M_pad, N_pad), out_dtype),
        grid_spec=pltpu.PrefetchScalarGridSpec(
            num_scalar_prefetch=0,
            grid=grid,
            in_specs=[
                pl.BlockSpec((tm, tk), lambda i, j, k: (i, k)),   # x tile
                pl.BlockSpec((tk, tn), lambda i, j, k: (k, j)),   # W^T tile (K, N)
                pl.BlockSpec((1, tn), lambda i, j, k: (0, j)),    # bias tile
            ],
            out_specs=pl.BlockSpec((tm, tn), lambda i, j, k: (i, j)),
            scratch_shapes=scratch,
        ),
        compiler_params=pltpu.CompilerParams(
            dimension_semantics=("parallel", "parallel", "arbitrary"),
            vmem_limit_bytes=vmem_limit,
        ),
        cost_estimate=cost,
    )(x_c, w_t_pad, b_pad)

    if (M_pad, N_pad) != (M, n_out):
        out_padded = out_padded[:M, :n_out]
    return out_padded


def linear_relu(x, weight, bias, *, compute_dtype=jnp.bfloat16, out_dtype=None):
    """y = relu(x @ weight.T + bias).   weight: (N, K) PyTorch nn.Linear layout."""
    N, K = weight.shape
    assert x.shape[-1] == K and bias.shape == (N,)
    hw = _hw_limits()
    tn, tk = _choose_nk_tiles(N, K, hw)
    w_t_pad, b_pad = prepare_weight_bias(weight, bias, compute_dtype, tn, tk)
    return _linear_relu_prepared(x, w_t_pad, b_pad, N, tn=tn, tk=tk,
                                 compute_dtype=compute_dtype, hw=hw,
                                 out_dtype=out_dtype)


def xavier_uniform(key, out_features, in_features, dtype=jnp.float32):
    # Matches torch.nn.init.xavier_uniform_ (gain=1).
    limit = jnp.sqrt(6.0 / (in_features + out_features))
    return jax.random.uniform(
        key, (out_features, in_features), dtype=dtype, minval=-limit, maxval=limit
    )


class LinearReLU:
    """Module-style wrapper: xavier weight, zero bias, cached padded/transposed
    bf16 weight so the per-call hot path never re-reads/re-casts W in HBM."""

    def __init__(self, in_features, out_features, *, key,
                 compute_dtype=jnp.bfloat16):
        self.in_features = in_features
        self.out_features = out_features
        self.compute_dtype = compute_dtype
        self.weight = xavier_uniform(key, out_features, in_features)   # (N, K)
        self.bias = jnp.zeros((out_features,), jnp.float32)
        self._hw = _hw_limits()
        self._tn, self._tk = _choose_nk_tiles(out_features, in_features, self._hw)
        self._w_prepared, self._b_prepared = prepare_weight_bias(
            self.weight, self.bias, compute_dtype, self._tn, self._tk)

    def __call__(self, x, out_dtype=None):
        return _linear_relu_prepared(
            x, self._w_prepared, self._b_prepared, self.out_features,
            tn=self._tn, tk=self._tk, compute_dtype=self.compute_dtype,
            hw=self._hw, out_dtype=out_dtype)


if __name__ == "__main__":
    key = jax.random.PRNGKey(0)
    k_x, k_w = jax.random.split(key)

    batch = 8
    in_features = 32
    out_features = 64

    x = jax.random.normal(k_x, (batch, in_features), dtype=jnp.float32)
    weight = xavier_uniform(k_w, out_features, in_features)        # (N, K)
    bias = jnp.zeros((out_features,), dtype=jnp.float32)           # constant 0

    ref = jnp.maximum(x @ weight.T + bias, 0.0)

    # Strict f32 path — tight check against the plain-JAX reference.
    out_f32 = linear_relu(x, weight, bias, compute_dtype=jnp.float32)
    jax.block_until_ready(out_f32)
    assert out_f32.shape == (batch, out_features)
    assert jnp.allclose(out_f32, ref, atol=1e-5, rtol=1e-5)

    # Module-style path: cached transposed/padded bf16 weight, f32 MXU
    # accumulation directly in the output tile.
    mod = LinearReLU(in_features, out_features, key=k_w,
                     compute_dtype=jnp.bfloat16)
    out_mod = mod(x)
    jax.block_until_ready(out_mod)
    assert out_mod.shape == (batch, out_features)
    assert jnp.allclose(out_mod, ref, atol=2e-2, rtol=2e-2)

    print("KERNEL_OK")
</pallas_src>

<mosaic_0001>
module attributes {stable_mosaic.version = 11 : i64} {
  func.func @_linear_relu_kernel_f32out(%arg0: i32, %arg1: i32, %arg2: i32, %arg3: memref<8x128xf32, #tpu.memory_space<vmem>>, %arg4: memref<128x128xf32, #tpu.memory_space<vmem>>, %arg5: memref<1x128xf32, #tpu.memory_space<vmem>>, %arg6: memref<8x128xf32, #tpu.memory_space<vmem>>) attributes {dimension_semantics = [#tpu.dimension_semantics<parallel>, #tpu.dimension_semantics<parallel>, #tpu.dimension_semantics<arbitrary>], iteration_bounds = array<i64: 1, 1, 1>, scalar_prefetch = 0 : i64, scratch_operands = 0 : i64, tpu.core_type = #tpu.core_type<tc>, window_params = [{transform_indices = @transform_0, window_bounds = array<i64: 8, 128>}, {transform_indices = @transform_1, window_bounds = array<i64: 128, 128>}, {transform_indices = @transform_2, window_bounds = array<i64: 1, 128>}, {transform_indices = @transform_3, window_bounds = array<i64: 8, 128>}]} {
    %c0_i32 = arith.constant 0 : i32
    %0 = arith.cmpi eq, %arg2, %c0_i32 : i32
    %1 = arith.extui %0 : i1 to i32
    %c0_i32_0 = arith.constant 0 : i32
    %2 = arith.cmpi ne, %1, %c0_i32_0 : i32
    scf.if %2 {
      %cst_10 = arith.constant 0.000000e+00 : f32
      %12 = vector.broadcast %cst_10 : f32 to vector<8x128xf32>
      %c0_11 = arith.constant 0 : index
      %c0_12 = arith.constant 0 : index
      %13 = vector.load %arg6[%c0_11, %c0_12] : memref<8x128xf32, #tpu.memory_space<vmem>>, vector<8x128xf32>
      tpu.vector_store %arg6[%c0_11, %c0_12], %12 {strides = array<i32>} : memref<8x128xf32, #tpu.memory_space<vmem>>, vector<8x128xf32>,
    } else {
    }
    %c0 = arith.constant 0 : index
    %c0_1 = arith.constant 0 : index
    %3 = vector.load %arg6[%c0, %c0_1] : memref<8x128xf32, #tpu.memory_space<vmem>>, vector<8x128xf32>
    %c0_2 = arith.constant 0 : index
    %c0_3 = arith.constant 0 : index
    %4 = vector.load %arg3[%c0_2, %c0_3] : memref<8x128xf32, #tpu.memory_space<vmem>>, vector<8x128xf32>
    %c0_4 = arith.constant 0 : index
    %c0_5 = arith.constant 0 : index
    %5 = vector.load %arg4[%c0_4, %c0_5] : memref<128x128xf32, #tpu.memory_space<vmem>>, vector<128x128xf32>
    %cst = arith.constant dense<0.000000e+00> : vector<8x128xf32>
    %6 = tpu.matmul %4, %5, %cst {dimension_numbers = #tpu.dot_dimension_numbers<[1], [0], [0], [1], [0, 0, 1, 1], [], []>} : vector<8x128xf32>, vector<128x128xf32>, vector<8x128xf32> -> vector<8x128xf32>
    %7 = arith.addf %3, %6 : vector<8x128xf32>
    %c0_6 = arith.constant 0 : index
    %c0_7 = arith.constant 0 : index
    %8 = vector.load %arg6[%c0_6, %c0_7] : memref<8x128xf32, #tpu.memory_space<vmem>>, vector<8x128xf32>
    tpu.vector_store %arg6[%c0_6, %c0_7], %7 {strides = array<i32>} : memref<8x128xf32, #tpu.memory_space<vmem>>, vector<8x128xf32>,
    %c0_i32_8 = arith.constant 0 : i32
    %9 = arith.cmpi eq, %arg2, %c0_i32_8 : i32
    %10 = arith.extui %9 : i1 to i32
    %c0_i32_9 = arith.constant 0 : i32
    %11 = arith.cmpi ne, %10, %c0_i32_9 : i32
    scf.if %11 {
      %c0_10 = arith.constant 0 : index
      %c0_11 = arith.constant 0 : index
      %12 = vector.load %arg6[%c0_10, %c0_11] : memref<8x128xf32, #tpu.memory_space<vmem>>, vector<8x128xf32>
      %c0_12 = arith.constant 0 : index
      %c0_13 = arith.constant 0 : index
      %13 = vector.load %arg5[%c0_12, %c0_13] : memref<1x128xf32, #tpu.memory_space<vmem>>, vector<1x128xf32>
      %14 = vector.broadcast %13 : vector<1x128xf32> to vector<8x128xf32>
      %15 = arith.addf %12, %14 : vector<8x128xf32>
      %cst_14 = arith.constant 0.000000e+00 : f32
      %16 = vector.broadcast %cst_14 : f32 to vector<8x128xf32>
      %17 = arith.maximumf %15, %16 : vector<8x128xf32>
      %c0_15 = arith.constant 0 : index
      %c0_16 = arith.constant 0 : index
      %18 = vector.load %arg6[%c0_15, %c0_16] : memref<8x128xf32, #tpu.memory_space<vmem>>, vector<8x128xf32>
      tpu.vector_store %arg6[%c0_15, %c0_16], %17 {strides = array<i32>} : memref<8x128xf32, #tpu.memory_space<vmem>>, vector<8x128xf32>,
    } else {
    }
    return
  }
  func.func @transform_0(%arg0: i32, %arg1: i32, %arg2: i32) -> (i32, i32) {
    %c0_i32 = arith.constant 0 : i32
    return %arg0, %arg2 : i32, i32
  }
  func.func @transform_1(%arg0: i32, %arg1: i32, %arg2: i32) -> (i32, i32) {
    %c0_i32 = arith.constant 0 : i32
    return %arg2, %arg1 : i32, i32
  }
  func.func @transform_2(%arg0: i32, %arg1: i32, %arg2: i32) -> (i32, i32) {
    %c0_i32 = arith.constant 0 : i32
    %c0_i32_0 = arith.constant 0 : i32
    return %c0_i32, %arg1 : i32, i32
  }
  func.func @transform_3(%arg0: i32, %arg1: i32, %arg2: i32) -> (i32, i32) {
    %c0_i32 = arith.constant 0 : i32
    return %arg0, %arg1 : i32, i32
  }
}

</mosaic_0001>

<llo_original>
// kernel: tpu_custom_call.1
$region0: #{tpu_custom_call.1}
  #allocation0 [shape = 'u32[]', space=smem, size = 0x4, offset = 0x4, fixed_abs, tag = 'smem constant byte address 0x4 - core index']
  #allocation1 [shape = 'u32[144,128]{1,0:T(1,128)}', space=vmem, size = 0x12000, scoped, tag = 'internal scratch']
  %s0 = inlined_call_operand.hbm [shape: f32[8,128], index: 0, kind: input, shape index: {}]
  %s1 = inlined_call_operand.hbm [shape: f32[128,128], index: 1, kind: input, shape index: {}]
  %s2 = inlined_call_operand.vmem [shape: f32[1,128], index: 2, kind: input, shape index: {}]
  %s3 = inlined_call_operand.hbm [shape: f32[8,128], index: 3, kind: output, shape index: {}]
  %s4 = sld [smem:[#allocation0]]
  $region38: #{tpu_custom_call.1} parent=0
    _
  %s6 = ssub.s32 1, %s4
  %s7 = scalar_select 0, %s6, %s4
  $region1: #{tpu_custom_call.1} parent=0
    #allocation2 [shape = 'u8[4096]{0}', space=vmem, size = 0x1000, scoped, tag = 'input window, operand 0, single buffered']
    #allocation3 [shape = 's32[1]{0}', space=sflag, size = 0x4, scoped, tag = 'scoped memory for tpu_custom_call.1']
    #allocation4 [shape = 's32[1]{0}', space=sflag, size = 0x4, scoped, tag = 'scoped memory for tpu_custom_call.1']
    #allocation5 [shape = 'u8[65536]{0}', space=vmem, size = 0x10000, scoped, tag = 'input window, operand 1, single buffered']
    #allocation6 [shape = 's32[1]{0}', space=sflag, size = 0x4, scoped, tag = 'scoped memory for tpu_custom_call.1']
    #allocation7 [shape = 'u8[4096]{0}', space=vmem, size = 0x1000, scoped, tag = 'output window, operand 0, single buffered']
    %8 = vsyncpa [#allocation3], 0
    %9 = vsyncpa [#allocation6], 0
    %10 = vsyncpa [#allocation4], 0
    // Predicated region
    $region2: #{tpu_custom_call.1} parent=1 // pred_check
      _
    $region3: #{tpu_custom_call.1} parent=1 // pred_check_branch
      %12 = sbr.rel (0) target = $region5
    $region4: #{tpu_custom_call.1} parent=1 // pred_region
      %s14 = ssub.s32 128, 128
      %15 = vsyncadd [#allocation3], %s14
      %s17 = sshll.u32 [#allocation2], 4
      %s18 = int_to_ptr.vmem [resolvable:$true] %s17
      %20 = dma.hbm_to_vmem [thread:$0]  %s0, 128, %s18, [#allocation3]
    $region5: #{tpu_custom_call.1} parent=1 // pred_fallthru
      _
    // Predicated region
    $region6: #{tpu_custom_call.1} parent=1 // pred_check
      _
    $region7: #{tpu_custom_call.1} parent=1 // pred_check_branch
      %22 = sbr.rel (0) target = $region9
    $region8: #{tpu_custom_call.1} parent=1 // pred_region
      %s24 = ssub.s32 2048, 2048
      %25 = vsyncadd [#allocation6], %s24
      %s26 = sshll.u32 [#allocation5], 4
      %s27 = int_to_ptr.vmem [resolvable:$true] %s26
      %32 = dma.hbm_to_vmem [thread:$0]  %s1, 2048, %s27, [#allocation6], 128, 128, 8
    $region9: #{tpu_custom_call.1} parent=1 // pred_fallthru
      _
    // Predicated region
    $region10: #{tpu_custom_call.1} parent=1 // pred_check
      _
    $region11: #{tpu_custom_call.1} parent=1 // pred_check_branch
      %34 = sbr.rel (0) target = $region13
    $region12: #{tpu_custom_call.1} parent=1 // pred_region
      _
    $region13: #{tpu_custom_call.1} parent=1 // pred_fallthru
      _
    // Predicated region
    $region14: #{tpu_custom_call.1} parent=1 // pred_check
      _
    $region15: #{tpu_custom_call.1} parent=1 // pred_check_branch
      %36 = sbr.rel (0) target = $region17
    $region16: #{tpu_custom_call.1} parent=1 // pred_region
      %37 = dma.done [#allocation3], 128
    $region17: #{tpu_custom_call.1} parent=1 // pred_fallthru
      _
    // Predicated region
    $region18: #{tpu_custom_call.1} parent=1 // pred_check
      _
    $region19: #{tpu_custom_call.1} parent=1 // pred_check_branch
      %39 = sbr.rel (0) target = $region21
    $region20: #{tpu_custom_call.1} parent=1 // pred_region
      %40 = dma.done [#allocation6], 2048
    $region21: #{tpu_custom_call.1} parent=1 // pred_fallthru
      _
    %p41 = scmp.eq.s32.totalorder 0, 0
    // Predicated region
    $region22: #{tpu_custom_call.1} parent=1 // pred_check
      %p42 = pneg %p41
    $region23: #{tpu_custom_call.1} parent=1 // pred_check_branch
      %44 = sbr.rel (%p42) target = $region25
    $region24: #{tpu_custom_call.1} parent=1 // pred_region
      %45 = vst [vmem:[#allocation7] sm:$0xff] 0.0
    $region25: #{tpu_custom_call.1} parent=1 // pred_fallthru
      _
    %v46 = vld [vmem:[#allocation7] sm:$0xff]
    %v47 = vld [vmem:[#allocation2] sm:$0xff]
    %v48 = vld [vmem:[#allocation5] sm:$0xff]
    %v49 = vld [vmem:[#allocation5 + $0x8] sm:$0xff]
    %v50 = vld [vmem:[#allocation5 + $0x10] sm:$0xff]
    %v51 = vld [vmem:[#allocation5 + $0x18] sm:$0xff]
    %v52 = vld [vmem:[#allocation5 + $0x20] sm:$0xff]
    %v53 = vld [vmem:[#allocation5 + $0x28] sm:$0xff]
    %v54 = vld [vmem:[#allocation5 + $0x30] sm:$0xff]
    %v55 = vld [vmem:[#allocation5 + $0x38] sm:$0xff]
    %v56 = vld [vmem:[#allocation5 + $0x40] sm:$0xff]
    %v57 = vld [vmem:[#allocation5 + $0x48] sm:$0xff]
    %v58 = vld [vmem:[#allocation5 + $0x50] sm:$0xff]
    %v59 = vld [vmem:[#allocation5 + $0x58] sm:$0xff]
    %v60 = vld [vmem:[#allocation5 + $0x60] sm:$0xff]
    %v61 = vld [vmem:[#allocation5 + $0x68] sm:$0xff]
    %v62 = vld [vmem:[#allocation5 + $0x70] sm:$0xff]
    %v63 = vld [vmem:[#allocation5 + $0x78] sm:$0xff]
    %64 = vmatprep.subr.mxu0 0.0
    %65 = vmatpush1.msra.mxu0 %v48
    %66 = vmatprep.subr.mxu0 0.0
    %67 = vmatpush1.msra.mxu0 %v49
    %68 = vmatprep.subr.mxu0 0.0
    %69 = vmatpush1.msra.mxu0 %v50
    %70 = vmatprep.subr.mxu0 0.0
    %71 = vmatpush1.msra.mxu0 %v51
    %72 = vmatprep.subr.mxu0 0.0
    %73 = vmatpush1.msra.mxu0 %v52
    %74 = vmatprep.subr.mxu0 0.0
    %75 = vmatpush1.msra.mxu0 %v53
    %76 = vmatprep.subr.mxu0 0.0
    %77 = vmatpush1.msra.mxu0 %v54
    %78 = vmatprep.subr.mxu0 0.0
    %79 = vmatpush1.msra.mxu0 %v55
    %80 = vmatprep.subr.mxu0 0.0
    %81 = vmatpush1.msra.mxu0 %v56
    %82 = vmatprep.subr.mxu0 0.0
    %83 = vmatpush1.msra.mxu0 %v57
    %84 = vmatprep.subr.mxu0 0.0
    %85 = vmatpush1.msra.mxu0 %v58
    %86 = vmatprep.subr.mxu0 0.0
    %87 = vmatpush1.msra.mxu0 %v59
    %88 = vmatprep.subr.mxu0 0.0
    %89 = vmatpush1.msra.mxu0 %v60
    %90 = vmatprep.subr.mxu0 0.0
    %91 = vmatpush1.msra.mxu0 %v61
    %92 = vmatprep.subr.mxu0 0.0
    %93 = vmatpush1.msra.mxu0 %v62
    %94 = vmatprep.subr.mxu0 0.0
    %95 = vmatpush1.msra.mxu0 %v63
    %96 = vmatprep.subr.mxu0 0.0
    %97 = vmatpush1.msra.mxu0 0.0
    %98 = vmatprep.subr.mxu0 0.0
    %99 = vmatpush1.msra.mxu0 0.0
    %100 = vmatprep.subr.mxu0 0.0
    %101 = vmatpush1.msra.mxu0 0.0
    %102 = vmatprep.subr.mxu0 0.0
    %103 = vmatpush1.msra.mxu0 0.0
    %104 = vmatprep.subr.mxu0 0.0
    %105 = vmatpush1.msra.mxu0 0.0
    %106 = vmatprep.subr.mxu0 0.0
    %107 = vmatpush1.msra.mxu0 0.0
    %108 = vmatprep.subr.mxu0 0.0
    %109 = vmatpush1.msra.mxu0 0.0
    %110 = vmatprep.subr.mxu0 0.0
    %111 = vmatpush1.msra.mxu0 0.0
    %112 = vmatprep.subr.mxu0 0.0
    %113 = vmatpush1.msra.mxu0 0.0
    %114 = vmatprep.subr.mxu0 0.0
    %115 = vmatpush1.msra.mxu0 0.0
    %116 = vmatprep.subr.mxu0 0.0
    %117 = vmatpush1.msra.mxu0 0.0
    %118 = vmatprep.subr.mxu0 0.0
    %119 = vmatpush1.msra.mxu0 0.0
    %120 = vmatprep.subr.mxu0 0.0
    %121 = vmatpush1.msra.mxu0 0.0
    %122 = vmatprep.subr.mxu0 0.0
    %123 = vmatpush1.msra.mxu0 0.0
    %124 = vmatprep.subr.mxu0 0.0
    %125 = vmatpush1.msra.mxu0 0.0
    %126 = vmatprep.subr.mxu0 0.0
    %127 = vmatpush1.msra.mxu0 0.0
    %128 = vmatprep.mubr.f32.mxu0 0.0
    %129 = vmatmul.mubr.f32.gmra.mrb[0].mxu0 %v47
    %v130 = vpop.f32.mrb[0].mxu0
    %v131 = vadd.f32 0.0, %v130
    %v132 = vpop.f32.mrb[0].mxu0
    %133 = vdwg.mxu0
    %v134 = vadd.f32 %v46, %v131
    %135 = vst [vmem:[#allocation7] sm:$0xff] %v134
    // Predicated region
    $region26: #{tpu_custom_call.1} parent=1 // pred_check
      %p136 = pneg %p41
    $region27: #{tpu_custom_call.1} parent=1 // pred_check_branch
      %138 = sbr.rel (%p136) target = $region29
    $region28: #{tpu_custom_call.1} parent=1 // pred_region
      %v139 = vld [vmem:[#allocation7] sm:$0xff]
      %v140 = vld [vmem:[%s2] sm:$0x1]
      %v142 = vlaneseq
      %v143 = vshrl.u32 %v142, 7
      %v144 = vsub.s32 0, %v143
      %v145 = vrot.slane %v140, %v144
      %v147 = vadd.f32 %v139, %v145
      %v148 = vmax.f32 %v147, 0.0
      %149 = vst [vmem:[#allocation7] sm:$0xff] %v148
    $region29: #{tpu_custom_call.1} parent=1 // pred_fallthru
      _
    // Predicated region
    $region30: #{tpu_custom_call.1} parent=1 // pred_check
      _
    $region31: #{tpu_custom_call.1} parent=1 // pred_check_branch
      %151 = sbr.rel (0) target = $region33
    $region32: #{tpu_custom_call.1} parent=1 // pred_region
      %s153 = ssub.s32 128, 128
      %154 = vsyncadd [#allocation4], %s153
      %s156 = sshll.u32 [#allocation7], 4
      %s157 = int_to_ptr.vmem [resolvable:$true] %s156
      %159 = dma.vmem_to_hbm [thread:$0]  %s157, 128, %s3, [#allocation4]
    $region33: #{tpu_custom_call.1} parent=1 // pred_fallthru
      _
    // Predicated region
    $region34: #{tpu_custom_call.1} parent=1 // pred_check
      _
    $region35: #{tpu_custom_call.1} parent=1 // pred_check_branch
      %161 = sbr.rel (0) target = $region37
    $region36: #{tpu_custom_call.1} parent=1 // pred_region
      %162 = dma.done [#allocation4], 128
    $region37: #{tpu_custom_call.1} parent=1 // pred_fallthru
      _
    %163 = vsyncpa [#allocation3], 1
    %164 = vsyncpa [#allocation6], 1
    %165 = vsyncpa [#allocation4], 1

</llo_original>
